<compile_context>
chip_gen: v7x
topology: tpu7x:2x2x1
jax: 0.10.0
libtpu: 0.0.40
codegen_flags: <defaults>
</compile_context>

<pallas_src>
import math
import functools

import jax
import jax.numpy as jnp
from jax.experimental import pallas as pl
from jax.experimental.pallas import tpu as pltpu

LANE = 128
SUBLANE = 8
ALIGN = SUBLANE * LANE            # slabs padded (<=1023 elems) to this boundary
MAX_TILE_ROWS = 2048              # (2048, 128) f32 = 1 MiB per input block
VMEM_LIMIT_BYTES = 64 * 1024 * 1024


def _cdiv(a, b):
    return -(-a // b)


# ----------------------------------------------------------------------------
# Fused kernel: sum((y_hat - target)^2)  and  sum_i sum(log(lk_i))
# ----------------------------------------------------------------------------
def _rd_kernel(*refs, n_lk, nsteps, sse_nblocks, sse_valid, lk_nblocks, lk_valid):
    a_ref, b_ref = refs[0], refs[1]
    lk_refs = refs[2:2 + n_lk]
    sse_out = refs[2 + n_lk]
    log_out = refs[3 + n_lk]

    step = pl.program_id(0)

    @pl.when(step == 0)
    def _():
        sse_out[...] = jnp.zeros_like(sse_out)
        log_out[...] = jnp.zeros_like(log_out)

    def _block_sum(vals):
        # (blk, 128) -> (8, 128) partials: sublane-major vreg regroup + VALU
        # add tree.  No XLU / cross-lane work in the hot loop.
        blk = vals.shape[0]
        return jnp.sum(vals.reshape(blk // SUBLANE, SUBLANE, LANE), axis=0)

    def _tail_mask(blk, block_idx, valid):
        # Element ids of the statically-known last block vs. valid count.
        # int32 is fine up to ~2**31 elements (~8 GiB of f32).
        base = block_idx * blk * LANE
        ids = (base
               + jax.lax.broadcasted_iota(jnp.int32, (blk, LANE), 0) * LANE
               + jax.lax.broadcasted_iota(jnp.int32, (blk, LANE), 1))
        return ids < valid

    def _accumulate(vals_fn, acc_ref, blk, nblocks, valid):
        """Accumulate this input's contribution for the current grid step.

        `nblocks` / `valid` are static Python ints, so the mask only exists in
        the code path for the single ragged last block; blocks past this
        input's extent are statically gated off (their clamped index_map means
        the last block is simply kept resident: no extra DMA, no compute).
        """
        exact = (valid == nblocks * blk * LANE)

        def plain():
            acc_ref[...] += _block_sum(vals_fn(None))

        def ragged():
            acc_ref[...] += _block_sum(vals_fn(_tail_mask(blk, nblocks - 1, valid)))

        if exact:
            if nblocks == nsteps:
                plain()
            else:
                pl.when(step < nblocks)(plain)
        else:
            last = nblocks - 1
            if last > 0:
                pl.when(step < last)(plain)
            if nsteps == 1:
                ragged()
            else:
                pl.when(step == last)(ragged)

    # ---------------- sum of squared error ----------------
    def _sse_vals(mask):
        d = a_ref[...].astype(jnp.float32) - b_ref[...].astype(jnp.float32)
        sq = d * d
        return sq if mask is None else jnp.where(mask, sq, 0.0)

    _accumulate(_sse_vals, sse_out, a_ref.shape[0], sse_nblocks, sse_valid)

    # ---------------- sum of log-likelihoods ----------------
    for lk_ref, nb, nv in zip(lk_refs, lk_nblocks, lk_valid):
        def _lk_vals(mask, _ref=lk_ref):
            x = _ref[...].astype(jnp.float32)
            if mask is not None:
                x = jnp.where(mask, x, 1.0)    # mask BEFORE log: log(1) == 0
            return jnp.log(x)

        _accumulate(_lk_vals, log_out, lk_ref.shape[0], nb, nv)


# ----------------------------------------------------------------------------
# Wrappers
# ----------------------------------------------------------------------------
def _as_slab(x):
    """Flatten to a lane-dense (rows, 128) slab with rows % 8 == 0.

    Returns (slab, valid_element_count).  Padding only fires (Python-level)
    when the element count is not already a multiple of 1024; padded / ragged
    elements are masked in-kernel, so the pad value is irrelevant.
    """
    flat = x.reshape(-1)
    n = flat.shape[0]
    rem = (-n) % ALIGN
    if rem:
        # TODO(synk): jnp.pad materialises a copy of the whole array when it
        # fires; a split main/tail reduction would avoid that extra HBM pass
        # for non-multiple-of-1024 inputs.
        flat = jnp.pad(flat, (0, rem))
    return flat.reshape(flat.shape[0] // LANE, LANE), n


@jax.jit
def _rd_forward(y_hat, target, likelihoods, lmbda):
    N, _, H, W = target.shape
    num_pixels = N * H * W

    a_slab, n_sse = _as_slab(y_hat)
    b_slab, _ = _as_slab(target)

    lk_slabs, lk_valid = [], []
    for lk in likelihoods:
        s, n = _as_slab(lk)
        lk_slabs.append(s)
        lk_valid.append(n)

    rows_a = a_slab.shape[0]
    blk_a = min(MAX_TILE_ROWS, rows_a)
    nblocks_a = _cdiv(rows_a, blk_a)

    lk_blk = [min(MAX_TILE_ROWS, s.shape[0]) for s in lk_slabs]
    lk_nblocks = [_cdiv(s.shape[0], b) for s, b in zip(lk_slabs, lk_blk)]

    nsteps = max([nblocks_a] + lk_nblocks)

    def _clamped(nb):
        # Clamp so the DMA never leaves the array; once clamped the block index
        # stops changing, so the duplicated block is neither re-DMA'd nor
        # (thanks to the static pl.when gating) computed on.
        return lambda i: (jnp.minimum(i, nb - 1), 0)

    in_specs = (
        [pl.BlockSpec((blk_a, LANE), _clamped(nblocks_a)),
         pl.BlockSpec((blk_a, LANE), _clamped(nblocks_a))]
        + [pl.BlockSpec((b, LANE), _clamped(nb))
           for b, nb in zip(lk_blk, lk_nblocks)]
    )
    out_specs = [pl.BlockSpec((SUBLANE, LANE), lambda i: (0, 0)),
                 pl.BlockSpec((SUBLANE, LANE), lambda i: (0, 0))]
    out_shape = (jax.ShapeDtypeStruct((SUBLANE, LANE), jnp.float32),
                 jax.ShapeDtypeStruct((SUBLANE, LANE), jnp.float32))

    n_lk_total = sum(lk_valid)
    cost = pl.CostEstimate(
        flops=3 * n_sse + 2 * n_lk_total,
        transcendentals=n_lk_total,
        bytes_accessed=(a_slab.size * a_slab.dtype.itemsize
                        + b_slab.size * b_slab.dtype.itemsize
                        + sum(s.size * s.dtype.itemsize for s in lk_slabs)
                        + 2 * SUBLANE * LANE * 4),
    )

    kernel = functools.partial(
        _rd_kernel,
        n_lk=len(lk_slabs),
        nsteps=nsteps,
        sse_nblocks=nblocks_a,
        sse_valid=n_sse,
        lk_nblocks=tuple(lk_nblocks),
        lk_valid=tuple(lk_valid),
    )

    sse_part, log_part = pl.pallas_call(
        kernel,
        out_shape=out_shape,
        grid_spec=pltpu.PrefetchScalarGridSpec(
            num_scalar_prefetch=0,
            grid=(nsteps,),
            in_specs=in_specs,
            out_specs=out_specs,
        ),
        compiler_params=pltpu.CompilerParams(
            # TODO(synk): on v7x a leading CORE_PARALLEL axis (one (8,128)
            # partial per TensorCore) would split this reduction across both
            # TensorCores; v5e/v6e have a single TC so it is omitted here.
            dimension_semantics=("arbitrary",),
            vmem_limit_bytes=VMEM_LIMIT_BYTES,
        ),
        cost_estimate=cost,
    )(a_slab, b_slab, *lk_slabs)

    sse = jnp.sum(sse_part)
    log_sum = jnp.sum(log_part)

    mse = sse / jnp.float32(n_sse)                        # torch MSELoss 'mean'
    bpp = log_sum / jnp.float32(-math.log(2) * num_pixels)
    loss = lmbda * mse + bpp
    return {"bpp_loss": bpp, "mse_loss": mse, "loss": loss}


class RDLoss:
    """JAX / Pallas port of the PyTorch `rdloss` module."""

    def __init__(self, lmbda=0.01, return_type="all"):
        self.lmbda = lmbda
        self.return_type = return_type

    def __call__(self, y_hat, y_likelihoods, target):
        lks = (
            tuple(y_likelihoods)
            if isinstance(y_likelihoods, (list, tuple))
            else (y_likelihoods,)
        )
        out = _rd_forward(y_hat, target, lks, jnp.float32(self.lmbda))
        if self.return_type == "all":
            return out
        return out[self.return_type]


# ----------------------------------------------------------------------------
# Demo / self-test
# ----------------------------------------------------------------------------
if __name__ == "__main__":
    key = jax.random.PRNGKey(0)
    k1, k2, k3, k4 = jax.random.split(key, 4)

    # small shapes consistent with the module's forward
    N, C, H, W = 2, 4, 16, 16
    y_hat = jax.random.normal(k1, (N, C, H, W), dtype=jnp.float32)
    target = jax.random.normal(k2, (N, C, H, W), dtype=jnp.float32)

    # two likelihood tensors (strictly positive, in (0, 1]); the second one has
    # 256 elements so it exercises the in-kernel ragged-tail masking path.
    lk1 = jax.random.uniform(k3, (N, 8, 8, 8), minval=0.05, maxval=1.0, dtype=jnp.float32)
    lk2 = jax.random.uniform(k4, (N, 8, 4, 4), minval=0.05, maxval=1.0, dtype=jnp.float32)
    y_likelihoods = (lk1, lk2)

    loss_fn = RDLoss(lmbda=0.01, return_type="all")
    out = loss_fn(y_hat, y_likelihoods, target)
    out = jax.tree_util.tree_map(jax.block_until_ready, out)

    # reference check in plain JAX
    num_pixels = N * H * W
    ref_bpp = sum(
        jnp.sum(jnp.log(lk)) / (-math.log(2) * num_pixels) for lk in y_likelihoods
    )
    ref_mse = jnp.mean((y_hat - target) ** 2)
    ref_loss = 0.01 * ref_mse + ref_bpp

    assert jnp.allclose(out["bpp_loss"], ref_bpp, rtol=1e-4, atol=1e-5)
    assert jnp.allclose(out["mse_loss"], ref_mse, rtol=1e-4, atol=1e-5)
    assert jnp.allclose(out["loss"], ref_loss, rtol=1e-4, atol=1e-5)

    print("KERNEL_OK")
</pallas_src>

<mosaic_0001>
module attributes {stable_mosaic.version = 11 : i64} {
  func.func @_rd_kernel(%arg0: i32, %arg1: memref<16x128xf32, #tpu.memory_space<vmem>>, %arg2: memref<16x128xf32, #tpu.memory_space<vmem>>, %arg3: memref<8x128xf32, #tpu.memory_space<vmem>>, %arg4: memref<8x128xf32, #tpu.memory_space<vmem>>, %arg5: memref<8x128xf32, #tpu.memory_space<vmem>>, %arg6: memref<8x128xf32, #tpu.memory_space<vmem>>) attributes {dimension_semantics = [#tpu.dimension_semantics<arbitrary>], iteration_bounds = array<i64: 1>, scalar_prefetch = 0 : i64, scratch_operands = 0 : i64, tpu.core_type = #tpu.core_type<tc>, window_params = [{transform_indices = @transform_0, window_bounds = array<i64: 16, 128>}, {transform_indices = @transform_1, window_bounds = array<i64: 16, 128>}, {transform_indices = @transform_2, window_bounds = array<i64: 8, 128>}, {transform_indices = @transform_3, window_bounds = array<i64: 8, 128>}, {pipeline_mode = #tpu.pipeline_mode<synchronous>, transform_indices = @transform_4, window_bounds = array<i64: 8, 128>}, {pipeline_mode = #tpu.pipeline_mode<synchronous>, transform_indices = @transform_5, window_bounds = array<i64: 8, 128>}]} {
    %c0_i32 = arith.constant 0 : i32
    %0 = arith.cmpi eq, %arg0, %c0_i32 : i32
    %1 = arith.extui %0 : i1 to i32
    %c0_i32_0 = arith.constant 0 : i32
    %2 = arith.cmpi ne, %1, %c0_i32_0 : i32
    scf.if %2 {
      %cst_24 = arith.constant 0.000000e+00 : f32
      %37 = vector.broadcast %cst_24 : f32 to vector<8x128xf32>
      %c0_25 = arith.constant 0 : index
      %c0_26 = arith.constant 0 : index
      %38 = vector.load %arg5[%c0_25, %c0_26] : memref<8x128xf32, #tpu.memory_space<vmem>>, vector<8x128xf32>
      tpu.vector_store %arg5[%c0_25, %c0_26], %37 {strides = array<i32>} : memref<8x128xf32, #tpu.memory_space<vmem>>, vector<8x128xf32>,
      %cst_27 = arith.constant 0.000000e+00 : f32
      %39 = vector.broadcast %cst_27 : f32 to vector<8x128xf32>
      %c0_28 = arith.constant 0 : index
      %c0_29 = arith.constant 0 : index
      %40 = vector.load %arg6[%c0_28, %c0_29] : memref<8x128xf32, #tpu.memory_space<vmem>>, vector<8x128xf32>
      tpu.vector_store %arg6[%c0_28, %c0_29], %39 {strides = array<i32>} : memref<8x128xf32, #tpu.memory_space<vmem>>, vector<8x128xf32>,
    } else {
    }
    %c0 = arith.constant 0 : index
    %c0_1 = arith.constant 0 : index
    %3 = vector.load %arg5[%c0, %c0_1] : memref<8x128xf32, #tpu.memory_space<vmem>>, vector<8x128xf32>
    %c0_2 = arith.constant 0 : index
    %c0_3 = arith.constant 0 : index
    %4 = vector.load %arg1[%c0_2, %c0_3] : memref<16x128xf32, #tpu.memory_space<vmem>>, vector<16x128xf32>
    %c0_4 = arith.constant 0 : index
    %c0_5 = arith.constant 0 : index
    %5 = vector.load %arg2[%c0_4, %c0_5] : memref<16x128xf32, #tpu.memory_space<vmem>>, vector<16x128xf32>
    %6 = arith.subf %4, %5 : vector<16x128xf32>
    %7 = arith.mulf %6, %6 : vector<16x128xf32>
    %8 = vector.shape_cast %7 : vector<16x128xf32> to vector<2x8x128xf32>
    %cst = arith.constant dense<0.000000e+00> : vector<8x128xf32>
    %9 = vector.multi_reduction <add>, %8, %cst [0] : vector<2x8x128xf32> to vector<8x128xf32>
    %10 = arith.addf %3, %9 : vector<8x128xf32>
    %c0_6 = arith.constant 0 : index
    %c0_7 = arith.constant 0 : index
    %11 = vector.load %arg5[%c0_6, %c0_7] : memref<8x128xf32, #tpu.memory_space<vmem>>, vector<8x128xf32>
    tpu.vector_store %arg5[%c0_6, %c0_7], %10 {strides = array<i32>} : memref<8x128xf32, #tpu.memory_space<vmem>>, vector<8x128xf32>,
    %c0_8 = arith.constant 0 : index
    %c0_9 = arith.constant 0 : index
    %12 = vector.load %arg6[%c0_8, %c0_9] : memref<8x128xf32, #tpu.memory_space<vmem>>, vector<8x128xf32>
    %c0_10 = arith.constant 0 : index
    %c0_11 = arith.constant 0 : index
    %13 = vector.load %arg3[%c0_10, %c0_11] : memref<8x128xf32, #tpu.memory_space<vmem>>, vector<8x128xf32>
    %14 = math.log %13 : vector<8x128xf32>
    %15 = vector.shape_cast %14 : vector<8x128xf32> to vector<1x8x128xf32>
    %cst_12 = arith.constant dense<0.000000e+00> : vector<8x128xf32>
    %16 = vector.multi_reduction <add>, %15, %cst_12 [0] : vector<1x8x128xf32> to vector<8x128xf32>
    %17 = arith.addf %12, %16 : vector<8x128xf32>
    %c0_13 = arith.constant 0 : index
    %c0_14 = arith.constant 0 : index
    %18 = vector.load %arg6[%c0_13, %c0_14] : memref<8x128xf32, #tpu.memory_space<vmem>>, vector<8x128xf32>
    tpu.vector_store %arg6[%c0_13, %c0_14], %17 {strides = array<i32>} : memref<8x128xf32, #tpu.memory_space<vmem>>, vector<8x128xf32>,
    %c0_15 = arith.constant 0 : index
    %c0_16 = arith.constant 0 : index
    %19 = vector.load %arg6[%c0_15, %c0_16] : memref<8x128xf32, #tpu.memory_space<vmem>>, vector<8x128xf32>
    %20 = tpu.iota {dimensions = array<i32: 0>} : vector<8x128xi32>
    %c128_i32 = arith.constant 128 : i32
    %21 = vector.broadcast %c128_i32 : i32 to vector<8x128xi32>
    %22 = arith.muli %20, %21 : vector<8x128xi32>
    %c0_i32_17 = arith.constant 0 : i32
    %23 = vector.broadcast %c0_i32_17 : i32 to vector<8x128xi32>
    %24 = arith.addi %23, %22 : vector<8x128xi32>
    %25 = tpu.iota {dimensions = array<i32: 1>} : vector<8x128xi32>
    %26 = arith.addi %24, %25 : vector<8x128xi32>
    %c256_i32 = arith.constant 256 : i32
    %27 = vector.broadcast %c256_i32 : i32 to vector<8x128xi32>
    %28 = arith.cmpi slt, %26, %27 : vector<8x128xi32>
    %c0_18 = arith.constant 0 : index
    %c0_19 = arith.constant 0 : index
    %29 = vector.load %arg4[%c0_18, %c0_19] : memref<8x128xf32, #tpu.memory_space<vmem>>, vector<8x128xf32>
    %cst_20 = arith.constant 1.000000e+00 : f32
    %30 = vector.broadcast %cst_20 : f32 to vector<8x128xf32>
    %31 = arith.select %28, %29, %30 : vector<8x128xi1>, vector<8x128xf32>
    %32 = math.log %31 : vector<8x128xf32>
    %33 = vector.shape_cast %32 : vector<8x128xf32> to vector<1x8x128xf32>
    %cst_21 = arith.constant dense<0.000000e+00> : vector<8x128xf32>
    %34 = vector.multi_reduction <add>, %33, %cst_21 [0] : vector<1x8x128xf32> to vector<8x128xf32>
    %35 = arith.addf %19, %34 : vector<8x128xf32>
    %c0_22 = arith.constant 0 : index
    %c0_23 = arith.constant 0 : index
    %36 = vector.load %arg6[%c0_22, %c0_23] : memref<8x128xf32, #tpu.memory_space<vmem>>, vector<8x128xf32>
    tpu.vector_store %arg6[%c0_22, %c0_23], %35 {strides = array<i32>} : memref<8x128xf32, #tpu.memory_space<vmem>>, vector<8x128xf32>,
    return
  }
  func.func @transform_0(%arg0: i32) -> (i32, i32) {
    %c0_i32 = arith.constant 0 : i32
    %0 = arith.minsi %arg0, %c0_i32 : i32
    %c0_i32_0 = arith.constant 0 : i32
    %c0_i32_1 = arith.constant 0 : i32
    return %0, %c0_i32_0 : i32, i32
  }
  func.func @transform_1(%arg0: i32) -> (i32, i32) {
    %c0_i32 = arith.constant 0 : i32
    %0 = arith.minsi %arg0, %c0_i32 : i32
    %c0_i32_0 = arith.constant 0 : i32
    %c0_i32_1 = arith.constant 0 : i32
    return %0, %c0_i32_0 : i32, i32
  }
  func.func @transform_2(%arg0: i32) -> (i32, i32) {
    %c0_i32 = arith.constant 0 : i32
    %0 = arith.minsi %arg0, %c0_i32 : i32
    %c0_i32_0 = arith.constant 0 : i32
    %c0_i32_1 = arith.constant 0 : i32
    return %0, %c0_i32_0 : i32, i32
  }
  func.func @transform_3(%arg0: i32) -> (i32, i32) {
    %c0_i32 = arith.constant 0 : i32
    %0 = arith.minsi %arg0, %c0_i32 : i32
    %c0_i32_0 = arith.constant 0 : i32
    %c0_i32_1 = arith.constant 0 : i32
    return %0, %c0_i32_0 : i32, i32
  }
  func.func @transform_4(%arg0: i32) -> (i32, i32) {
    %c0_i32 = arith.constant 0 : i32
    %c0_i32_0 = arith.constant 0 : i32
    %c0_i32_1 = arith.constant 0 : i32
    return %c0_i32, %c0_i32_0 : i32, i32
  }
  func.func @transform_5(%arg0: i32) -> (i32, i32) {
    %c0_i32 = arith.constant 0 : i32
    %c0_i32_0 = arith.constant 0 : i32
    %c0_i32_1 = arith.constant 0 : i32
    return %c0_i32, %c0_i32_0 : i32, i32
  }
}

</mosaic_0001>

<llo_original>
// kernel: _rd_forward.1
$region0: #{_rd_forward.1}
  #allocation0 [shape = 'u32[]', space=smem, size = 0x4, offset = 0x4, fixed_abs, tag = 'smem constant byte address 0x4 - core index']
  #allocation1 [shape = 'u32[144,128]{1,0:T(1,128)}', space=vmem, size = 0x12000, scoped, tag = 'internal scratch']
  %s0 = inlined_call_operand.hbm [shape: f32[16,128], index: 0, kind: input, shape index: {}]
  %s1 = inlined_call_operand.hbm [shape: f32[16,128], index: 1, kind: input, shape index: {}]
  %s2 = inlined_call_operand.hbm [shape: f32[8,128], index: 2, kind: input, shape index: {}]
  %s3 = inlined_call_operand.hbm [shape: f32[8,128], index: 3, kind: input, shape index: {}]
  %s4 = inlined_call_operand.hbm [shape: f32[8,128], index: 4, kind: output, shape index: {0}]
  %s5 = inlined_call_operand.hbm [shape: f32[8,128], index: 5, kind: output, shape index: {1}]
  %6 = xla_tuple %s4, %s5
  %s7 = sld [smem:[#allocation0]]
  $region54: #{_rd_forward.1} parent=0
    _
  %s9 = ssub.s32 1, %s7
  %s10 = scalar_select 0, %s9, %s7
  $region1: #{_rd_forward.1} parent=0
    #allocation2 [shape = 'u8[8192]{0}', space=vmem, size = 0x2000, scoped, tag = 'input window, operand 0, single buffered']
    #allocation3 [shape = 's32[1]{0}', space=sflag, size = 0x4, scoped, tag = 'scoped memory for _rd_forward.1']
    #allocation4 [shape = 's32[1]{0}', space=sflag, size = 0x4, scoped, tag = 'scoped memory for _rd_forward.1']
    #allocation5 [shape = 'u8[8192]{0}', space=vmem, size = 0x2000, scoped, tag = 'input window, operand 1, single buffered']
    #allocation6 [shape = 's32[1]{0}', space=sflag, size = 0x4, scoped, tag = 'scoped memory for _rd_forward.1']
    #allocation7 [shape = 'u8[4096]{0}', space=vmem, size = 0x1000, scoped, tag = 'input window, operand 2, single buffered']
    #allocation8 [shape = 'u8[4096]{0}', space=vmem, size = 0x1000, scoped, tag = 'input window, operand 3, single buffered']
    #allocation9 [shape = 's32[1]{0}', space=sflag, size = 0x4, scoped, tag = 'scoped memory for _rd_forward.1']
    #allocation10 [shape = 'u8[4096]{0}', space=vmem, size = 0x1000, scoped, tag = 'output window, operand 0, single buffered']
    #allocation11 [shape = 'u8[4096]{0}', space=vmem, size = 0x1000, scoped, tag = 'output window, operand 1, single buffered']
    #allocation12 [shape = 's32[1]{0}', space=sflag, size = 0x4, scoped, tag = 'scoped memory for _rd_forward.1']
    %11 = vsyncpa [#allocation3], 0
    %12 = vsyncpa [#allocation6], 0
    %13 = vsyncpa [#allocation9], 0
    %14 = vsyncpa [#allocation4], 0
    %15 = vsyncpa [#allocation12], 0
    // Predicated region
    $region2: #{_rd_forward.1} parent=1 // pred_check
      _
    $region3: #{_rd_forward.1} parent=1 // pred_check_branch
      %17 = sbr.rel (0) target = $region5
    $region4: #{_rd_forward.1} parent=1 // pred_region
      %s19 = ssub.s32 256, 256
      %20 = vsyncadd [#allocation3], %s19
      %s21 = sshll.u32 [#allocation2], 4
      %s22 = int_to_ptr.vmem [resolvable:$true] %s21
      %27 = dma.hbm_to_vmem [thread:$0]  %s0, 256, %s22, [#allocation3], 128, 128, 8
    $region5: #{_rd_forward.1} parent=1 // pred_fallthru
      _
    // Predicated region
    $region6: #{_rd_forward.1} parent=1 // pred_check
      _
    $region7: #{_rd_forward.1} parent=1 // pred_check_branch
      %29 = sbr.rel (0) target = $region9
    $region8: #{_rd_forward.1} parent=1 // pred_region
      %s31 = ssub.s32 256, 256
      %32 = vsyncadd [#allocation6], %s31
      %s33 = sshll.u32 [#allocation5], 4
      %s34 = int_to_ptr.vmem [resolvable:$true] %s33
      %39 = dma.hbm_to_vmem [thread:$0]  %s1, 256, %s34, [#allocation6], 128, 128, 8
    $region9: #{_rd_forward.1} parent=1 // pred_fallthru
      _
    // Predicated region
    $region10: #{_rd_forward.1} parent=1 // pred_check
      _
    $region11: #{_rd_forward.1} parent=1 // pred_check_branch
      %41 = sbr.rel (0) target = $region13
    $region12: #{_rd_forward.1} parent=1 // pred_region
      %s43 = ssub.s32 128, 128
      %44 = vsyncadd [#allocation6], %s43
      %s46 = sshll.u32 [#allocation7], 4
      %s47 = int_to_ptr.vmem [resolvable:$true] %s46
      %49 = dma.hbm_to_vmem [thread:$0]  %s2, 128, %s47, [#allocation6]
    $region13: #{_rd_forward.1} parent=1 // pred_fallthru
      _
    // Predicated region
    $region14: #{_rd_forward.1} parent=1 // pred_check
      _
    $region15: #{_rd_forward.1} parent=1 // pred_check_branch
      %51 = sbr.rel (0) target = $region17
    $region16: #{_rd_forward.1} parent=1 // pred_region
      %s53 = ssub.s32 128, 128
      %54 = vsyncadd [#allocation9], %s53
      %s56 = sshll.u32 [#allocation8], 4
      %s57 = int_to_ptr.vmem [resolvable:$true] %s56
      %59 = dma.hbm_to_vmem [thread:$0]  %s3, 128, %s57, [#allocation9]
    $region17: #{_rd_forward.1} parent=1 // pred_fallthru
      _
    // Predicated region
    $region18: #{_rd_forward.1} parent=1 // pred_check
      _
    $region19: #{_rd_forward.1} parent=1 // pred_check_branch
      %61 = sbr.rel (0) target = $region21
    $region20: #{_rd_forward.1} parent=1 // pred_region
      %62 = dma.done [#allocation3], 256
    $region21: #{_rd_forward.1} parent=1 // pred_fallthru
      _
    // Predicated region
    $region22: #{_rd_forward.1} parent=1 // pred_check
      _
    $region23: #{_rd_forward.1} parent=1 // pred_check_branch
      %64 = sbr.rel (0) target = $region25
    $region24: #{_rd_forward.1} parent=1 // pred_region
      %65 = dma.done [#allocation6], 256
    $region25: #{_rd_forward.1} parent=1 // pred_fallthru
      _
    // Predicated region
    $region26: #{_rd_forward.1} parent=1 // pred_check
      _
    $region27: #{_rd_forward.1} parent=1 // pred_check_branch
      %67 = sbr.rel (0) target = $region29
    $region28: #{_rd_forward.1} parent=1 // pred_region
      %68 = dma.done [#allocation6], 128
    $region29: #{_rd_forward.1} parent=1 // pred_fallthru
      _
    // Predicated region
    $region30: #{_rd_forward.1} parent=1 // pred_check
      _
    $region31: #{_rd_forward.1} parent=1 // pred_check_branch
      %70 = sbr.rel (0) target = $region33
    $region32: #{_rd_forward.1} parent=1 // pred_region
      %71 = dma.done [#allocation9], 128
    $region33: #{_rd_forward.1} parent=1 // pred_fallthru
      _
    %p72 = scmp.eq.s32.totalorder 0, 0
    // Predicated region
    $region34: #{_rd_forward.1} parent=1 // pred_check
      %p73 = pneg %p72
    $region35: #{_rd_forward.1} parent=1 // pred_check_branch
      %75 = sbr.rel (%p73) target = $region37
    $region36: #{_rd_forward.1} parent=1 // pred_region
      %76 = vst [vmem:[#allocation10] sm:$0xff] 0.0
      %77 = vst [vmem:[#allocation11] sm:$0xff] 0.0
    $region37: #{_rd_forward.1} parent=1 // pred_fallthru
      _
    %v78 = vld [vmem:[#allocation10] sm:$0xff]
    %v79 = vld [vmem:[#allocation2] sm:$0xff]
    %v80 = vld [vmem:[#allocation2 + $0x8] sm:$0xff]
    %v81 = vld [vmem:[#allocation5] sm:$0xff]
    %v82 = vld [vmem:[#allocation5 + $0x8] sm:$0xff]
    %v83 = vsub.f32 %v79, %v81
    %v84 = vsub.f32 %v80, %v82
    %v85 = vmul.f32 %v83, %v83
    %v86 = vmul.f32 %v84, %v84
    %v87 = vadd.f32 %v85, %v86
    %v88 = vadd.f32 %v78, %v87
    %89 = vst [vmem:[#allocation10] sm:$0xff] %v88
    %v90 = vld [vmem:[#allocation11] sm:$0xff]
    %v91 = vld [vmem:[#allocation7] sm:$0xff]
    %v92 = vlog2.pop %v91
    %v93 = vmul.f32 %v92, 0.6931472
    %v94 = vadd.f32 %v93, 0.0
    %v95 = vadd.f32 %v90, %v94
    %96 = vst [vmem:[#allocation11] sm:$0xff] %v95
    %v97 = vld [vmem:[#allocation11] sm:$0xff]
    %v98 = vlaneseq
    %v99 = vshrl.u32 %v98, 7
    %v100 = vmul.u32 %v99, 128
    %v101 = vlaneseq
    %v102 = vand.u32 %v101, 127
    %v103 = vadd.s32 %v100, %v102
    %vm104 = vcmp.lt.s32.totalorder %v103, 256
    %v105 = vld [vmem:[#allocation8] sm:$0xff]
    %v106 = vsel %vm104, %v105, 1.0
    %v107 = vlog2.pop %v106
    %v108 = vmul.f32 %v107, 0.6931472
    %v109 = vadd.f32 %v108, 0.0
    %v110 = vadd.f32 %v97, %v109
    %111 = vst [vmem:[#allocation11] sm:$0xff] %v110
    // Predicated region
    $region38: #{_rd_forward.1} parent=1 // pred_check
      _
    $region39: #{_rd_forward.1} parent=1 // pred_check_branch
      %113 = sbr.rel (0) target = $region41
    $region40: #{_rd_forward.1} parent=1 // pred_region
      %s115 = ssub.s32 128, 128
      %116 = vsyncadd [#allocation4], %s115
      %s118 = sshll.u32 [#allocation10], 4
      %s119 = int_to_ptr.vmem [resolvable:$true] %s118
      %121 = dma.vmem_to_hbm [thread:$0]  %s119, 128, %s4, [#allocation4]
    $region41: #{_rd_forward.1} parent=1 // pred_fallthru
      _
    // Predicated region
    $region42: #{_rd_forward.1} parent=1 // pred_check
      _
    $region43: #{_rd_forward.1} parent=1 // pred_check_branch
      %123 = sbr.rel (0) target = $region45
    $region44: #{_rd_forward.1} parent=1 // pred_region
      %s125 = ssub.s32 128, 128
      %126 = vsyncadd [#allocation12], %s125
      %s128 = sshll.u32 [#allocation11], 4
      %s129 = int_to_ptr.vmem [resolvable:$true] %s128
      %131 = dma.vmem_to_hbm [thread:$0]  %s129, 128, %s5, [#allocation12]
    $region45: #{_rd_forward.1} parent=1 // pred_fallthru
      _
    // Predicated region
    $region46: #{_rd_forward.1} parent=1 // pred_check
      _
    $region47: #{_rd_forward.1} parent=1 // pred_check_branch
      %133 = sbr.rel (0) target = $region49
    $region48: #{_rd_forward.1} parent=1 // pred_region
      %134 = dma.done [#allocation4], 128
    $region49: #{_rd_forward.1} parent=1 // pred_fallthru
      _
    // Predicated region
    $region50: #{_rd_forward.1} parent=1 // pred_check
      _
    $region51: #{_rd_forward.1} parent=1 // pred_check_branch
      %136 = sbr.rel (0) target = $region53
    $region52: #{_rd_forward.1} parent=1 // pred_region
      %137 = dma.done [#allocation12], 128
    $region53: #{_rd_forward.1} parent=1 // pred_fallthru
      _
    %138 = vsyncpa [#allocation3], 1
    %139 = vsyncpa [#allocation6], 1
    %140 = vsyncpa [#allocation9], 1
    %141 = vsyncpa [#allocation4], 1
    %142 = vsyncpa [#allocation12], 1

</llo_original>
